<compile_context>
chip_gen: v5e
topology: v5e:2x2
jax: 0.10.0
libtpu: 0.0.40
codegen_flags: <defaults>
</compile_context>

<pallas_src>
import functools
import math
from typing import NamedTuple

import jax
import jax.numpy as jnp
from jax.experimental import pallas as pl
from jax.experimental.pallas import tpu as pltpu


# ----------------------------- kernels ---------------------------------------


def _linear_relu_kernel(x_ref, w_ref, b_ref, o_ref):
    """One (tm, tn) output tile with the full K dimension resident in VMEM."""
    y = jnp.dot(x_ref[...], w_ref[...], preferred_element_type=jnp.float32)
    y = y + b_ref[...]                       # bias broadcast over rows
    o_ref[...] = jnp.maximum(y, 0.0).astype(o_ref.dtype)


def _linear_relu_ktiled_kernel(x_ref, w_ref, b_ref, o_ref, acc_ref):
    """Large-K fallback: reduction tiled over the innermost grid axis."""
    k = pl.program_id(2)

    @pl.when(k == 0)
    def _():
        acc_ref[...] = jnp.zeros_like(acc_ref)

    acc_ref[...] += jnp.dot(x_ref[...], w_ref[...],
                            preferred_element_type=jnp.float32)

    @pl.when(k == pl.num_programs(2) - 1)
    def _():
        y = acc_ref[...] + b_ref[...]
        o_ref[...] = jnp.maximum(y, 0.0).astype(o_ref.dtype)


# ----------------------------- tile selection --------------------------------

_TM_MAX = 256       # worst-case batch tile used for VMEM budgeting
_LANE_CAP = 8192    # sanity cap on output-tile width


def _round_up(x, m):
    return (x + m - 1) // m * m


def _vmem_limit_bytes():
    """Scoped VMEM to request: ~3/4 of physical, clamped to [32, 96] MiB.

    v7x (64 MiB physical) -> 48 MiB; v5e/v6e (128 MiB) -> 96 MiB.
    Falls back to the v7x-conservative value if the query is unavailable.
    """
    cap = None
    try:
        cap = int(pltpu.get_tpu_info().vmem_capacity_bytes)
    except Exception:
        cap = None
    if not cap or cap <= 0:
        cap = 64 * 1024 * 1024
    return max(32 * 1024 * 1024, min(96 * 1024 * 1024, (cap * 3) // 4))


def _split_n(Nr):
    """Smallest split of an (already 128-aligned) N extent into >=2 equal
    128-multiple tiles with NO extra padding.  Returns Nr if impossible."""
    q = Nr // 128
    for d in range(2, q + 1):
        if q % d == 0:
            return 128 * (q // d)
    return Nr


class _Layout(NamedTuple):
    K: int
    N: int
    Kp: int          # padded K held by the prepared weights
    Np: int          # padded N held by the prepared weights / bias
    tn: int          # output-column tile
    tk: int          # reduction tile (== Kp means full-K, no K grid axis)
    vmem_limit: int  # bytes to request from the compiler


def _weight_layout(K, N, w_itemsize, out_itemsize=4):
    vmem_limit = _vmem_limit_bytes()
    budget = vmem_limit - 4 * 1024 * 1024      # headroom for internal scratch

    Nr = _round_up(N, 128)

    # ---- full-K path: solve max tn fitting the double-buffered working set --
    x_bytes = 2 * _TM_MAX * K * w_itemsize                       # activations
    per_tn = 2 * K * w_itemsize + 2 * _TM_MAX * out_itemsize + 2 * 4
    tn_vmem = (budget - x_bytes) // per_tn if budget > x_bytes else 0
    tn_vmem = (tn_vmem // 128) * 128

    if tn_vmem >= 128:
        tn_cap = min(_LANE_CAP, tn_vmem)
        if tn_cap >= 512:
            tn_cap = (tn_cap // 256) * 256     # prefer 256-multiples (MXU)
        tn = min(Nr, tn_cap)
        if tn >= Nr and Nr >= 256:
            # Ensure >=2 N tiles so the outer "parallel" axis feeds both
            # TensorCores on v7x (harmless single extra step on v5e/v6e).
            tn = _split_n(Nr)
        Np = _round_up(N, tn)
        return _Layout(K=K, N=N, Kp=K, Np=Np, tn=tn, tk=K,
                       vmem_limit=vmem_limit)

    # ---- large-K fallback: also tile the reduction dimension ----------------
    tn = min(Nr, 512)
    per_tk = 2 * _TM_MAX * w_itemsize + 2 * tn * w_itemsize
    fixed = _TM_MAX * tn * 4 + 2 * _TM_MAX * tn * out_itemsize + 2 * tn * 4
    tk = (budget - fixed) // per_tk if budget > fixed else 0
    tk = max(512, (tk // 512) * 512)
    tk = min(tk, _round_up(K, 512))
    Kp = _round_up(K, tk)
    Np = _round_up(N, tn)
    return _Layout(K=K, N=N, Kp=Kp, Np=Np, tn=tn, tk=tk,
                   vmem_limit=vmem_limit)


# ----------------------------- forward pass ----------------------------------


@functools.partial(jax.jit, static_argnames=("layout",))
def _linear_relu_impl(x, w_p, b_p, layout):
    """y = relu(x @ w + b) with pre-padded, pre-cast weights.

    x: (M, K); w_p: (Kp, Np) compute dtype; b_p: (1, Np) f32."""
    out_dtype = x.dtype
    M, K = x.shape
    assert K == layout.K
    tn, tk, Kp, Np = layout.tn, layout.tk, layout.Kp, layout.Np

    # Activations streamed in the weights' compute dtype (bf16 by default).
    x_c = x.astype(w_p.dtype)

    # Batch tile: multiple of 16 rows (bf16 sublane packing).
    Mr = _round_up(M, 16)
    if Mr <= _TM_MAX:
        tm, Mp = Mr, Mr
    else:
        tm, Mp = _TM_MAX, _round_up(M, _TM_MAX)

    pad_m, pad_k = Mp - M, Kp - K
    if pad_m or pad_k:
        x_c = jnp.pad(x_c, ((0, pad_m), (0, pad_k)))

    grid_n = Np // tn
    grid_m = Mp // tm

    if tk == Kp:
        # Fast path: full K resident, one MXU matmul per output tile.
        # N axis OUTER so the big weight slab stays VMEM-resident across all
        # M tiles; only the small activation tile re-streams.
        grid = (grid_n, grid_m)
        in_specs = [
            pl.BlockSpec((tm, Kp), lambda j, i: (i, 0)),   # activations
            pl.BlockSpec((Kp, tn), lambda j, i: (0, j)),   # weight slab
            pl.BlockSpec((1, tn), lambda j, i: (0, j)),    # bias
        ]
        out_specs = pl.BlockSpec((tm, tn), lambda j, i: (i, j))
        kernel = _linear_relu_kernel
        scratch = []
        semantics = ("parallel", "parallel")
    else:
        # Large-K fallback: reduction axis innermost + f32 accumulator.
        grid = (grid_n, grid_m, Kp // tk)
        in_specs = [
            pl.BlockSpec((tm, tk), lambda j, i, k: (i, k)),
            pl.BlockSpec((tk, tn), lambda j, i, k: (k, j)),
            pl.BlockSpec((1, tn), lambda j, i, k: (0, j)),
        ]
        out_specs = pl.BlockSpec((tm, tn), lambda j, i, k: (i, j))
        kernel = _linear_relu_ktiled_kernel
        scratch = [pltpu.VMEM((tm, tn), jnp.float32)]
        semantics = ("parallel", "parallel", "arbitrary")

    out = pl.pallas_call(
        kernel,
        out_shape=jax.ShapeDtypeStruct((Mp, Np), out_dtype),
        grid_spec=pltpu.PrefetchScalarGridSpec(
            num_scalar_prefetch=0,
            grid=grid,
            in_specs=in_specs,
            out_specs=out_specs,
            scratch_shapes=scratch,
        ),
        compiler_params=pltpu.CompilerParams(
            dimension_semantics=semantics,
            vmem_limit_bytes=layout.vmem_limit,
        ),
    )(x_c, w_p, b_p)

    return out[:M, :layout.N]


# ----------------------------- module wrapper --------------------------------


def init_linear_layer_params(key, num_inputs, num_out, dtype=jnp.float32):
    """Matches torch.nn.Linear default init: U(-1/sqrt(fan_in), +1/sqrt(fan_in)).

    Weight is stored already transposed: (in_features, out_features)."""
    k_w, k_b = jax.random.split(key)
    bound = 1.0 / math.sqrt(num_inputs)
    w = jax.random.uniform(
        k_w, (num_inputs, num_out), dtype=dtype, minval=-bound, maxval=bound)
    b = jax.random.uniform(k_b, (num_out,), dtype=dtype, minval=-bound, maxval=bound)
    return w, b


def prepare_linear_params(w, b, compute_dtype=jnp.bfloat16):
    """One-time conversion: cast weights to the streaming dtype and pad to the
    tile layout.  Do this at init / load time, NOT per forward call."""
    K, N = w.shape
    assert b.shape == (N,)
    itemsize = jnp.dtype(compute_dtype).itemsize
    layout = _weight_layout(K, N, itemsize)

    w_p = w.astype(compute_dtype)
    b_p = b.astype(jnp.float32).reshape(1, N)
    pad_k, pad_n = layout.Kp - K, layout.Np - N
    if pad_k or pad_n:
        w_p = jnp.pad(w_p, ((0, pad_k), (0, pad_n)))
    if pad_n:
        b_p = jnp.pad(b_p, ((0, 0), (0, pad_n)))
    return (w_p, b_p, layout)


def linear_layer_forward(x, prepared):
    """Equivalent of LinearLayer.forward: Linear then ReLU."""
    w_p, b_p, layout = prepared
    return _linear_relu_impl(x, w_p, b_p, layout)


def _reference_forward(x, params):
    """Pure-JAX reference using the same bf16-in / f32-accumulate numerics."""
    w, b = params
    xb = x.astype(jnp.bfloat16).astype(jnp.float32)
    wb = w.astype(jnp.bfloat16).astype(jnp.float32)
    y = jnp.dot(xb, wb, precision=jax.lax.Precision.HIGHEST) + b.astype(jnp.float32)
    return jnp.maximum(y, 0.0).astype(x.dtype)


if __name__ == "__main__":
    key = jax.random.PRNGKey(0)

    # Small shapes consistent with the module: batch=8, num_inputs=256, num_out=512.
    batch, num_inputs, num_out = 8, 256, 512
    k_x, k_p = jax.random.split(key)
    x = jax.random.normal(k_x, (batch, num_inputs), dtype=jnp.float32)
    w, b = init_linear_layer_params(k_p, num_inputs, num_out)
    prepared = prepare_linear_params(w, b)           # one-time cast + pad

    out = jax.block_until_ready(linear_layer_forward(x, prepared))
    ref = _reference_forward(x, (w, b))
    assert out.shape == (batch, num_out), out.shape
    assert jnp.allclose(out, ref, atol=2e-3, rtol=2e-3), "mismatch vs reference"

    # Non-aligned shapes exercise the padding path.
    batch2, ni2, no2 = 3, 100, 200
    k_x2, k_p2 = jax.random.split(jax.random.PRNGKey(1))
    x2 = jax.random.normal(k_x2, (batch2, ni2), dtype=jnp.float32)
    w2, b2 = init_linear_layer_params(k_p2, ni2, no2)
    prepared2 = prepare_linear_params(w2, b2)
    out2 = jax.block_until_ready(linear_layer_forward(x2, prepared2))
    ref2 = _reference_forward(x2, (w2, b2))
    assert out2.shape == (batch2, no2), out2.shape
    assert jnp.allclose(out2, ref2, atol=2e-3, rtol=2e-3), "mismatch vs reference (padded)"

    print("KERNEL_OK")
</pallas_src>

<mosaic_0001>
module attributes {stable_mosaic.version = 11 : i64} {
  func.func @_linear_relu_kernel(%arg0: i32, %arg1: i32, %arg2: memref<16x256xbf16, #tpu.memory_space<vmem>>, %arg3: memref<256x256xbf16, #tpu.memory_space<vmem>>, %arg4: memref<1x256xf32, #tpu.memory_space<vmem>>, %arg5: memref<16x256xf32, #tpu.memory_space<vmem>>) attributes {dimension_semantics = [#tpu.dimension_semantics<parallel>, #tpu.dimension_semantics<parallel>], iteration_bounds = array<i64: 2, 1>, scalar_prefetch = 0 : i64, scratch_operands = 0 : i64, tpu.core_type = #tpu.core_type<tc>, window_params = [{transform_indices = @transform_0, window_bounds = array<i64: 16, 256>}, {transform_indices = @transform_1, window_bounds = array<i64: 256, 256>}, {transform_indices = @transform_2, window_bounds = array<i64: 1, 256>}, {transform_indices = @transform_3, window_bounds = array<i64: 16, 256>}]} {
    %c0 = arith.constant 0 : index
    %c0_0 = arith.constant 0 : index
    %0 = vector.load %arg2[%c0, %c0_0] : memref<16x256xbf16, #tpu.memory_space<vmem>>, vector<16x256xbf16>
    %c0_1 = arith.constant 0 : index
    %c0_2 = arith.constant 0 : index
    %1 = vector.load %arg3[%c0_1, %c0_2] : memref<256x256xbf16, #tpu.memory_space<vmem>>, vector<256x256xbf16>
    %cst = arith.constant dense<0.000000e+00> : vector<16x256xf32>
    %2 = tpu.matmul %0, %1, %cst {dimension_numbers = #tpu.dot_dimension_numbers<[1], [0], [0], [1], [0, 0, 1, 1], [], []>} : vector<16x256xbf16>, vector<256x256xbf16>, vector<16x256xf32> -> vector<16x256xf32>
    %c0_3 = arith.constant 0 : index
    %c0_4 = arith.constant 0 : index
    %3 = vector.load %arg4[%c0_3, %c0_4] : memref<1x256xf32, #tpu.memory_space<vmem>>, vector<1x256xf32>
    %4 = vector.broadcast %3 : vector<1x256xf32> to vector<16x256xf32>
    %5 = arith.addf %2, %4 : vector<16x256xf32>
    %cst_5 = arith.constant 0.000000e+00 : f32
    %6 = vector.broadcast %cst_5 : f32 to vector<16x256xf32>
    %7 = arith.maximumf %5, %6 : vector<16x256xf32>
    %c0_6 = arith.constant 0 : index
    %c0_7 = arith.constant 0 : index
    %8 = vector.load %arg5[%c0_6, %c0_7] : memref<16x256xf32, #tpu.memory_space<vmem>>, vector<16x256xf32>
    tpu.vector_store %arg5[%c0_6, %c0_7], %7 {strides = array<i32>} : memref<16x256xf32, #tpu.memory_space<vmem>>, vector<16x256xf32>,
    return
  }
  func.func @transform_0(%arg0: i32, %arg1: i32) -> (i32, i32) {
    %c0_i32 = arith.constant 0 : i32
    %c0_i32_0 = arith.constant 0 : i32
    return %arg1, %c0_i32 : i32, i32
  }
  func.func @transform_1(%arg0: i32, %arg1: i32) -> (i32, i32) {
    %c0_i32 = arith.constant 0 : i32
    %c0_i32_0 = arith.constant 0 : i32
    return %c0_i32, %arg0 : i32, i32
  }
  func.func @transform_2(%arg0: i32, %arg1: i32) -> (i32, i32) {
    %c0_i32 = arith.constant 0 : i32
    %c0_i32_0 = arith.constant 0 : i32
    return %c0_i32, %arg0 : i32, i32
  }
  func.func @transform_3(%arg0: i32, %arg1: i32) -> (i32, i32) {
    %c0_i32 = arith.constant 0 : i32
    return %arg1, %arg0 : i32, i32
  }
}

</mosaic_0001>

<llo_original>
// kernel: _linear_relu_impl.1
$region0: #{_linear_relu_impl.1}
  #allocation0 [shape = 'u32[]', space=smem, size = 0x4, offset = 0x4, fixed_abs, tag = 'smem constant byte address 0x4 - core index']
  #allocation1 [shape = 'u32[72,128]{1,0:T(1,128)}', space=vmem, size = 0x9000, scoped, tag = 'internal scratch']
  %s0 = inlined_call_operand.vmem [shape: bf16[16,256], index: 0, kind: input, shape index: {}]
  %s1 = inlined_call_operand.hbm [shape: bf16[256,512], index: 1, kind: input, shape index: {}]
  %s2 = inlined_call_operand.vmem [shape: f32[1,512], index: 2, kind: input, shape index: {}]
  %s3 = inlined_call_operand.vmem [shape: f32[16,512], index: 3, kind: output, shape index: {}]
  %s4 = sld [smem:[#allocation0]]
  $region68: #{_linear_relu_impl.1} parent=0
    _
  %s6 = ssub.s32 1, %s4
  %s7 = scalar_select 0, %s6, %s4
  $region1: #{_linear_relu_impl.1} parent=0
    #allocation2 [shape = 'u8[262144]{0}', space=vmem, size = 0x40000, scoped, tag = 'input window, operand 1']
    #allocation3 [shape = 's32[2]{0}', space=sflag, size = 0x8, scoped, tag = 'scoped memory for _linear_relu_impl.1']
    #allocation4 [shape = 'u8[32768]{0}', space=vmem, size = 0x8000, scoped, tag = 'output window, operand 0']
    %8 = vsyncpa [#allocation3], 0
    %s9 = scalar_lea.sflag [#allocation3], 1
    %10 = vsyncpa %s9, 0
    loop: start=0, step=1, limit=4
    $region2: #{_linear_relu_impl.1} parent=1 // loop_pre_header
      _
    $region3: #{_linear_relu_impl.1} parent=1 // loop_header
      %s12 = sphi 0, %s16
      %p13 = scmp.ge.s32.totalorder %s12, 4
      %s19 = sphi 0, %s31
      %s20 = sphi 0, %s27
      %s21 = sphi 0, %s19
      %s22 = sphi 0, %s20
      %s23 = sphi 0, %s21
      %s24 = sphi 0, %s22
      %s34 = sphi 0, %s36
      %s37 = sphi 0, %s34
      %s38 = sphi 0, %s37
      %s54 = sphi 0, %s38
      %s60 = sphi 0, %s62
      %s63 = sphi 0, %s60
      %s64 = sphi 0, %s63
      %s80 = sphi 0, %s64
      %s86 = sphi 0, %s88
      %s89 = sphi 0, %s86
      %s90 = sphi 0, %s89
      %s106 = sphi 0, %s90
      %s114 = sphi 0, %s116
      %s117 = sphi 0, %s114
      %s118 = sphi 0, %s117
      %s134 = sphi 0, %s118
    $region4: #{_linear_relu_impl.1} parent=1 // loop_header_branch
      %15 = sbr.rel (%p13) target = $region8
    $region5: #{_linear_relu_impl.1} parent=1 // loop_body
      %s17 = ssub.s32 %s12, 1
      %s18 = ssub.s32 %s12, 2
      %s25 = sadd.s32 1, %s20
      %p26 = scmp.ge.s32.totalorder %s25, 1
      %s27 = scalar_select %p26, 0, %s25
      %s28 = sadd.s32 1, %s19
      %s29 = scalar_select %p26, %s28, %s19
      %p30 = scmp.ge.s32.totalorder %s29, 2
      %s31 = scalar_select %p30, 0, %s29
      %s32 = ssub.s32 %s20, %s27
      %p33 = scmp.eq.s32.totalorder %s32, 0
      %s35 = sadd.s32 %s34, 1
      %s36 = scalar_select %p33, %s34, %s35
      %p39 = pneg %p33
      %p40 = scmp.eq.s32.totalorder %s12, 1
      %p41 = por %p39, %p40
      %p42 = scmp.ne.s32.totalorder %s34, %s37
      %p43 = scmp.eq.s32.totalorder %s12, 0
      %p44 = por %p42, %p43
      %p45 = scmp.ne.s32.totalorder %s34, %s37
      %p46 = scmp.eq.s32.totalorder %s17, 1
      %p47 = por %p45, %p46
      %p48 = scmp.ne.s32.totalorder %s37, %s38
      %p49 = scmp.eq.s32.totalorder %s17, 0
      %p50 = por %p48, %p49
      %p51 = scmp.ne.s32.totalorder %s37, %s38
      %p52 = scmp.eq.s32.totalorder %s18, 1
      %p53 = por %p51, %p52
      %p55 = scmp.ne.s32.totalorder %s38, %s54
      %p56 = scmp.eq.s32.totalorder %s18, 0
      %p57 = por %p55, %p56
      %s58 = ssub.s32 %s19, %s31
      %p59 = scmp.eq.s32.totalorder %s58, 0
      %s61 = sadd.s32 %s60, 1
      %s62 = scalar_select %p59, %s60, %s61
      %p65 = pneg %p59
      %p66 = scmp.eq.s32.totalorder %s12, 1
      %p67 = por %p65, %p66
      %p68 = scmp.ne.s32.totalorder %s60, %s63
      %p69 = scmp.eq.s32.totalorder %s12, 0
      %p70 = por %p68, %p69
      %p71 = scmp.ne.s32.totalorder %s60, %s63
      %p72 = scmp.eq.s32.totalorder %s17, 1
      %p73 = por %p71, %p72
      %p74 = scmp.ne.s32.totalorder %s63, %s64
      %p75 = scmp.eq.s32.totalorder %s17, 0
      %p76 = por %p74, %p75
      %p77 = scmp.ne.s32.totalorder %s63, %s64
      %p78 = scmp.eq.s32.totalorder %s18, 1
      %p79 = por %p77, %p78
      %p81 = scmp.ne.s32.totalorder %s64, %s80
      %p82 = scmp.eq.s32.totalorder %s18, 0
      %p83 = por %p81, %p82
      %s84 = ssub.s32 %s19, %s31
      %p85 = scmp.eq.s32.totalorder %s84, 0
      %s87 = sadd.s32 %s86, 1
      %s88 = scalar_select %p85, %s86, %s87
      %p91 = pneg %p85
      %p92 = scmp.eq.s32.totalorder %s12, 1
      %p93 = por %p91, %p92
      %p94 = scmp.ne.s32.totalorder %s86, %s89
      %p95 = scmp.eq.s32.totalorder %s12, 0
      %p96 = por %p94, %p95
      %p97 = scmp.ne.s32.totalorder %s86, %s89
      %p98 = scmp.eq.s32.totalorder %s17, 1
      %p99 = por %p97, %p98
      %p100 = scmp.ne.s32.totalorder %s89, %s90
      %p101 = scmp.eq.s32.totalorder %s17, 0
      %p102 = por %p100, %p101
      %p103 = scmp.ne.s32.totalorder %s89, %s90
      %p104 = scmp.eq.s32.totalorder %s18, 1
      %p105 = por %p103, %p104
      %p107 = scmp.ne.s32.totalorder %s90, %s106
      %p108 = scmp.eq.s32.totalorder %s18, 0
      %p109 = por %p107, %p108
      %s110 = ssub.s32 %s20, %s27
      %s111 = ssub.s32 %s19, %s31
      %s112 = sor.u32 %s110, %s111
      %p113 = scmp.eq.s32.totalorder %s112, 0
      %s115 = sadd.s32 %s114, 1
      %s116 = scalar_select %p113, %s114, %s115
      %p119 = pneg %p113
      %p120 = scmp.eq.s32.totalorder %s12, 1
      %p121 = por %p119, %p120
      %p122 = scmp.ne.s32.totalorder %s114, %s117
      %p123 = scmp.eq.s32.totalorder %s12, 0
      %p124 = por %p122, %p123
      %p125 = scmp.ne.s32.totalorder %s114, %s117
      %p126 = scmp.eq.s32.totalorder %s17, 1
      %p127 = por %p125, %p126
      %p128 = scmp.ne.s32.totalorder %s117, %s118
      %p129 = scmp.eq.s32.totalorder %s17, 0
      %p130 = por %p128, %p129
      %p131 = scmp.ne.s32.totalorder %s117, %s118
      %p132 = scmp.eq.s32.totalorder %s18, 1
      %p133 = por %p131, %p132
      %p135 = scmp.ne.s32.totalorder %s118, %s134
      %p136 = scmp.eq.s32.totalorder %s18, 0
      %p137 = por %p135, %p136
      %p138 = scmp.le.s32.totalorder 1, %s12
      %p139 = scmp.lt.s32.totalorder %s12, 3
      %p140 = pnand %p138, %p139
      %p141 = pneg %p140
      // Predicated region
      $region9: #{_linear_relu_impl.1} parent=5 // pred_check
        _
      $region10: #{_linear_relu_impl.1} parent=5 // pred_check_branch
        %143 = sbr.rel (%p140) target = $region12
      $region11: #{_linear_relu_impl.1} parent=5 // pred_region
        %s144 = ssub.s32 %s12, 1
        // Predicated region
        $region13: #{_linear_relu_impl.1} parent=11 // pred_check
          %p145 = pneg %p50
        $region14: #{_linear_relu_impl.1} parent=11 // pred_check_branch
          %147 = sbr.rel (%p145) target = $region16
        $region15: #{_linear_relu_impl.1} parent=11 // pred_region
          %s148 = smul.u32 2, %s22
          %p149 = scmp.lt.s32.totalorder %s148, 1
          %s150 = scalar_select %p149, %s148, 1
          %s151 = smul.addr %s150, 2
          %s152 = smul.addr %s151, 4
          %s153 = scalar_lea.vmem %s0, %s152
          %s154 = smul.u32 2, %s22
        $region16: #{_linear_relu_impl.1} parent=11 // pred_fallthru
          _
      $region12: #{_linear_relu_impl.1} parent=5 // pred_fallthru
        _
      %p155 = scmp.lt.s32.totalorder %s12, 2
      // Predicated region
      $region17: #{_linear_relu_impl.1} parent=5 // pred_check
        %p156 = pneg %p155
      $region18: #{_linear_relu_impl.1} parent=5 // pred_check_branch
        %158 = sbr.rel (%p156) target = $region20
      $region19: #{_linear_relu_impl.1} parent=5 // pred_region
        // Predicated region
        $region21: #{_linear_relu_impl.1} parent=19 // pred_check
          %p159 = pneg %p70
        $region22: #{_linear_relu_impl.1} parent=19 // pred_check_branch
          %161 = sbr.rel (%p159) target = $region24
        $region23: #{_linear_relu_impl.1} parent=19 // pred_region
          %s162 = sand.u32 %s60, 1
          %s163 = scalar_lea.sflag [#allocation3], %s162
          %s164 = sand.u32 %s60, 1
          %s165 = smul.addr %s164, 256
          %s166 = scalar_lea.vmem [#allocation2], %s165
          %s167 = smul.u32 2, %s19
          %169 = vsyncadd %s163, 0
          %s170 = smul.addr %s167, 4
          %s171 = scalar_lea.hbm %s1, %s170
          %s172 = sshll.u32 %s171, 4
          %s173 = int_to_ptr.hbm [resolvable:$true] %s172
          %s174 = sshll.u32 %s166, 4
          %s175 = int_to_ptr.vmem [resolvable:$true] %s174
          %180 = dma.hbm_to_vmem [thread:$0]  %s173, 4096, %s175, %s163, 256, 128, 8
        $region24: #{_linear_relu_impl.1} parent=19 // pred_fallthru
          _
        // Predicated region
        $region25: #{_linear_relu_impl.1} parent=19 // pred_check
          %p181 = pneg %p96
        $region26: #{_linear_relu_impl.1} parent=19 // pred_check_branch
          %183 = sbr.rel (%p181) target = $region28
        $region27: #{_linear_relu_impl.1} parent=19 // pred_region
          %s184 = smul.u32 2, %s19
          %p185 = scmp.lt.s32.totalorder %s184, 3
          %s186 = scalar_select %p185, %s184, 3
          %s187 = scalar_lea.vmem %s2, %s186
          %s188 = smul.u32 2, %s19
        $region28: #{_linear_relu_impl.1} parent=19 // pred_fallthru
          _
      $region20: #{_linear_relu_impl.1} parent=5 // pred_fallthru
        _
      %p189 = scmp.le.s32.totalorder 1, %s12
      %p190 = scmp.lt.s32.totalorder %s12, 3
      %p191 = pnand %p189, %p190
      %p192 = pneg %p191
      // Predicated region
      $region29: #{_linear_relu_impl.1} parent=5 // pred_check
        _
      $region30: #{_linear_relu_impl.1} parent=5 // pred_check_branch
        %194 = sbr.rel (%p191) target = $region32
      $region31: #{_linear_relu_impl.1} parent=5 // pred_region
        %s195 = ssub.s32 %s12, 1
        %s196 = sand.u32 %s63, 1
        %s197 = scalar_lea.sflag [#allocation3], %s196
        %s198 = sand.u32 %s63, 1
        %s199 = smul.addr %s198, 256
        %s200 = scalar_lea.vmem [#allocation2], %s199
        // Predicated region
        $region33: #{_linear_relu_impl.1} parent=31 // pred_check
          %p201 = pneg %p76
        $region34: #{_linear_relu_impl.1} parent=31 // pred_check_branch
          %203 = sbr.rel (%p201) target = $region36
        $region35: #{_linear_relu_impl.1} parent=31 // pred_region
          %205 = dma.done %s197, 4096
        $region36: #{_linear_relu_impl.1} parent=31 // pred_fallthru
          _
        %s206 = smul.u32 2, %s22
        %p207 = scmp.lt.s32.totalorder %s206, 1
        %s208 = scalar_select %p207, %s206, 1
        %s209 = smul.addr %s208, 2
        %s210 = smul.addr %s209, 4
        %s211 = scalar_lea.vmem %s0, %s210
        %p212 = pneg %p50
        %p213 = pneg %p47
        %s214 = sand.u32 %s63, 1
        %s215 = scalar_lea.sflag [#allocation3], %s214
        %s216 = sand.u32 %s63, 1
        %s217 = smul.addr %s216, 256
        %s218 = scalar_lea.vmem [#allocation2], %s217
        %p219 = pneg %p76
        %p220 = pneg %p73
        %s221 = smul.u32 2, %s21
        %p222 = scmp.lt.s32.totalorder %s221, 3
        %s223 = scalar_select %p222, %s221, 3
        %s224 = scalar_lea.vmem %s2, %s223
        %p225 = pneg %p102
        %p226 = pneg %p99
        %p227 = pneg %p130
        %p228 = pneg %p127
        %s229 = sand.u32 %s117, 1
        %s230 = sand.u32 %s117, 1
        %s231 = smul.addr %s230, 32
        %s232 = scalar_lea.vmem [#allocation4], %s231
        %s233 = smul.u32 2, %s22
        %p234 = scmp.lt.s32.totalorder %s233, 1
        %s235 = scalar_select %p234, %s233, 1
        %s236 = smul.addr %s235, 2
        %s237 = smul.addr %s236, 4
        %s238 = scalar_lea.vmem %s0, %s237
        %s239 = smul.u32 2, %s22
        %s240 = smul.u32 2, %s21
        %s241 = smul.u32 2, %s21
        %p242 = scmp.lt.s32.totalorder %s241, 3
        %s243 = scalar_select %p242, %s241, 3
        %s244 = scalar_lea.vmem %s2, %s243
        %s245 = smul.u32 2, %s21
        %s246 = smul.u32 2, %s22
        %s247 = smul.u32 2, %s21
        %v248 = vld [vmem:[%s238] sm:$0xff]
        %v249 = vld [vmem:[%s238 + $0x8] sm:$0xff]
        %v250 = vld [vmem:[%s200] sm:$0xff]
        %v251 = vld [vmem:[%s200 + $0x8] sm:$0xff]
        %v252 = vld [vmem:[%s200 + $0x10] sm:$0xff]
        %v253 = vld [vmem:[%s200 + $0x18] sm:$0xff]
        %v254 = vld [vmem:[%s200 + $0x20] sm:$0xff]
        %v255 = vld [vmem:[%s200 + $0x28] sm:$0xff]
        %v256 = vld [vmem:[%s200 + $0x30] sm:$0xff]
        %v257 = vld [vmem:[%s200 + $0x38] sm:$0xff]
        %v258 = vld [vmem:[%s200 + $0x40] sm:$0xff]
        %v259 = vld [vmem:[%s200 + $0x48] sm:$0xff]
        %v260 = vld [vmem:[%s200 + $0x50] sm:$0xff]
        %v261 = vld [vmem:[%s200 + $0x58] sm:$0xff]
        %v262 = vld [vmem:[%s200 + $0x60] sm:$0xff]
        %v263 = vld [vmem:[%s200 + $0x68] sm:$0xff]
        %v264 = vld [vmem:[%s200 + $0x70] sm:$0xff]
        %v265 = vld [vmem:[%s200 + $0x78] sm:$0xff]
        %v266 = vld [vmem:[%s200 + $0x80] sm:$0xff]
        %v267 = vld [vmem:[%s200 + $0x88] sm:$0xff]
        %v268 = vld [vmem:[%s200 + $0x90] sm:$0xff]
        %v269 = vld [vmem:[%s200 + $0x98] sm:$0xff]
        %v270 = vld [vmem:[%s200 + $0xa0] sm:$0xff]
        %v271 = vld [vmem:[%s200 + $0xa8] sm:$0xff]
        %v272 = vld [vmem:[%s200 + $0xb0] sm:$0xff]
        %v273 = vld [vmem:[%s200 + $0xb8] sm:$0xff]
        %v274 = vld [vmem:[%s200 + $0xc0] sm:$0xff]
        %v275 = vld [vmem:[%s200 + $0xc8] sm:$0xff]
        %v276 = vld [vmem:[%s200 + $0xd0] sm:$0xff]
        %v277 = vld [vmem:[%s200 + $0xd8] sm:$0xff]
        %v278 = vld [vmem:[%s200 + $0xe0] sm:$0xff]
        %v279 = vld [vmem:[%s200 + $0xe8] sm:$0xff]
        %v280 = vld [vmem:[%s200 + $0xf0] sm:$0xff]
        %v281 = vld [vmem:[%s200 + $0xf8] sm:$0xff]
        %v282 = vld [vmem:[%s244] sm:$0x3]
        %v284 = vperm.slane %v282, 0
        %v285 = vperm.slane %v282, 1
        %v290 = vunpack.c.l.b16 %v248
        %v291 = vunpack.c.h.b16 %v248
        %v292 = vunpack.c.l.b16 %v249
        %v293 = vunpack.c.h.b16 %v249
        %v294 = vpack.c.b16 %v292, %v290
        %v295 = vpack.c.b16 %v293, %v291
        %v330 = vunpack.c.l.b16 %v250
        %v331 = vunpack.c.h.b16 %v250
        %v332 = vunpack.c.l.b16 %v251
        %v333 = vunpack.c.h.b16 %v251
        %v334 = vunpack.c.l.b16 %v252
        %v335 = vunpack.c.h.b16 %v252
        %v336 = vunpack.c.l.b16 %v253
        %v337 = vunpack.c.h.b16 %v253
        %v338 = vunpack.c.l.b16 %v254
        %v339 = vunpack.c.h.b16 %v254
        %v340 = vunpack.c.l.b16 %v255
        %v341 = vunpack.c.h.b16 %v255
        %v342 = vunpack.c.l.b16 %v256
        %v343 = vunpack.c.h.b16 %v256
        %v344 = vunpack.c.l.b16 %v257
        %v345 = vunpack.c.h.b16 %v257
        %v346 = vunpack.c.l.b16 %v258
        %v347 = vunpack.c.h.b16 %v258
        %v348 = vunpack.c.l.b16 %v259
        %v349 = vunpack.c.h.b16 %v259
        %v350 = vunpack.c.l.b16 %v260
        %v351 = vunpack.c.h.b16 %v260
        %v352 = vunpack.c.l.b16 %v261
        %v353 = vunpack.c.h.b16 %v261
        %v354 = vunpack.c.l.b16 %v262
        %v355 = vunpack.c.h.b16 %v262
        %v356 = vunpack.c.l.b16 %v263
        %v357 = vunpack.c.h.b16 %v263
        %v358 = vunpack.c.l.b16 %v264
        %v359 = vunpack.c.h.b16 %v264
        %v360 = vunpack.c.l.b16 %v265
        %v361 = vunpack.c.h.b16 %v265
        %v362 = vunpack.c.l.b16 %v266
        %v363 = vunpack.c.h.b16 %v266
        %v364 = vunpack.c.l.b16 %v267
        %v365 = vunpack.c.h.b16 %v267
        %v366 = vunpack.c.l.b16 %v268
        %v367 = vunpack.c.h.b16 %v268
        %v368 = vunpack.c.l.b16 %v269
        %v369 = vunpack.c.h.b16 %v269
        %v370 = vunpack.c.l.b16 %v270
        %v371 = vunpack.c.h.b16 %v270
        %v372 = vunpack.c.l.b16 %v271
        %v373 = vunpack.c.h.b16 %v271
        %v374 = vunpack.c.l.b16 %v272
        %v375 = vunpack.c.h.b16 %v272
        %v376 = vunpack.c.l.b16 %v273
        %v377 = vunpack.c.h.b16 %v273
        %v378 = vunpack.c.l.b16 %v274
        %v379 = vunpack.c.h.b16 %v274
        %v380 = vunpack.c.l.b16 %v275
        %v381 = vunpack.c.h.b16 %v275
        %v382 = vunpack.c.l.b16 %v276
        %v383 = vunpack.c.h.b16 %v276
        %v384 = vunpack.c.l.b16 %v277
        %v385 = vunpack.c.h.b16 %v277
        %v386 = vunpack.c.l.b16 %v278
        %v387 = vunpack.c.h.b16 %v278
        %v388 = vunpack.c.l.b16 %v279
        %v389 = vunpack.c.h.b16 %v279
        %v390 = vunpack.c.l.b16 %v280
        %v391 = vunpack.c.h.b16 %v280
        %v392 = vunpack.c.l.b16 %v281
        %v393 = vunpack.c.h.b16 %v281
        %v394 = vpack.c.b16 %v332, %v330
        %v395 = vpack.c.b16 %v333, %v331
        %v396 = vpack.c.b16 %v336, %v334
        %v397 = vpack.c.b16 %v337, %v335
        %v398 = vpack.c.b16 %v340, %v338
        %v399 = vpack.c.b16 %v341, %v339
        %v400 = vpack.c.b16 %v344, %v342
        %v401 = vpack.c.b16 %v345, %v343
        %v402 = vpack.c.b16 %v348, %v346
        %v403 = vpack.c.b16 %v349, %v347
        %v404 = vpack.c.b16 %v352, %v350
        %v405 = vpack.c.b16 %v353, %v351
        %v406 = vpack.c.b16 %v356, %v354
        %v407 = vpack.c.b16 %v357, %v355
        %v408 = vpack.c.b16 %v360, %v358
        %v409 = vpack.c.b16 %v361, %v359
        %v410 = vpack.c.b16 %v364, %v362
        %v411 = vpack.c.b16 %v365, %v363
        %v412 = vpack.c.b16 %v368, %v366
        %v413 = vpack.c.b16 %v369, %v367
        %v414 = vpack.c.b16 %v372, %v370
        %v415 = vpack.c.b16 %v373, %v371
        %v416 = vpack.c.b16 %v376, %v374
        %v417 = vpack.c.b16 %v377, %v375
        %v418 = vpack.c.b16 %v380, %v378
        %v419 = vpack.c.b16 %v381, %v379
        %v420 = vpack.c.b16 %v384, %v382
        %v421 = vpack.c.b16 %v385, %v383
        %v422 = vpack.c.b16 %v388, %v386
        %v423 = vpack.c.b16 %v389, %v387
        %v424 = vpack.c.b16 %v392, %v390
        %v425 = vpack.c.b16 %v393, %v391
        %458 = vmatpush.bf16.msra.mxu0 %v408
        %459 = vmatpush.bf16.msra.mxu0 %v406
        %460 = vmatpush.bf16.msra.mxu0 %v404
        %461 = vmatpush.bf16.msra.mxu0 %v402
        %462 = vmatpush.bf16.msra.mxu0 %v400
        %463 = vmatpush.bf16.msra.mxu0 %v398
        %464 = vmatpush.bf16.msra.mxu0 %v396
        %465 = vmatpush.bf16.msra.mxu0 %v394
        %466 = vmatmul.bf16.gmra.mxu0 %v294
        %v467 = vpop.f32.mrf.mxu0
        %v468 = vadd.f32 %v284, %v467
        %v469 = vpop.f32.mrf.mxu0
        %v470 = vadd.f32 %v284, %v469
        %471 = vdwg.mxu0
        %472 = vmatpush.bf16.msra.mxu0 %v424
        %473 = vmatpush.bf16.msra.mxu0 %v422
        %474 = vmatpush.bf16.msra.mxu0 %v420
        %475 = vmatpush.bf16.msra.mxu0 %v418
        %476 = vmatpush.bf16.msra.mxu0 %v416
        %477 = vmatpush.bf16.msra.mxu0 %v414
        %478 = vmatpush.bf16.msra.mxu0 %v412
        %479 = vmatpush.bf16.msra.mxu0 %v410
        %480 = vmatmul.bf16.gmra.mxu0 %v295
        %v481 = vpop.f32.mrf.mxu0
        %v482 = vadd.f32 %v468, %v481
        %v483 = vpop.f32.mrf.mxu0
        %v484 = vadd.f32 %v470, %v483
        %485 = vdwg.mxu0
        %486 = vmatpush.bf16.msra.mxu0 %v409
        %487 = vmatpush.bf16.msra.mxu0 %v407
        %488 = vmatpush.bf16.msra.mxu0 %v405
        %489 = vmatpush.bf16.msra.mxu0 %v403
        %490 = vmatpush.bf16.msra.mxu0 %v401
        %491 = vmatpush.bf16.msra.mxu0 %v399
        %492 = vmatpush.bf16.msra.mxu0 %v397
        %493 = vmatpush.bf16.msra.mxu0 %v395
        %494 = vmatmul.bf16.gmra.mxu0 %v294
        %v495 = vpop.f32.mrf.mxu0
        %v496 = vadd.f32 %v285, %v495
        %v497 = vpop.f32.mrf.mxu0
        %v498 = vadd.f32 %v285, %v497
        %499 = vdwg.mxu0
        %500 = vmatpush.bf16.msra.mxu0 %v425
        %501 = vmatpush.bf16.msra.mxu0 %v423
        %502 = vmatpush.bf16.msra.mxu0 %v421
        %503 = vmatpush.bf16.msra.mxu0 %v419
        %504 = vmatpush.bf16.msra.mxu0 %v417
        %505 = vmatpush.bf16.msra.mxu0 %v415
        %506 = vmatpush.bf16.msra.mxu0 %v413
        %507 = vmatpush.bf16.msra.mxu0 %v411
        %508 = vmatmul.bf16.gmra.mxu0 %v295
        %v509 = vpop.f32.mrf.mxu0
        %v510 = vadd.f32 %v496, %v509
        %v511 = vpop.f32.mrf.mxu0
        %v512 = vadd.f32 %v498, %v511
        %513 = vdwg.mxu0
        %v514 = vmax.f32 %v482, 0.0
        %v515 = vmax.f32 %v510, 0.0
        %v516 = vmax.f32 %v484, 0.0
        %v517 = vmax.f32 %v512, 0.0
        %518 = vst [vmem:[%s232] sm:$0xff] %v514
        %519 = vst [vmem:[%s232 + $0x8] sm:$0xff] %v515
        %520 = vst [vmem:[%s232 + $0x10] sm:$0xff] %v516
        %521 = vst [vmem:[%s232 + $0x18] sm:$0xff] %v517
        %s522 = sand.u32 %s117, 1
        %s523 = sand.u32 %s117, 1
        %s524 = smul.addr %s523, 32
        %s525 = scalar_lea.vmem [#allocation4], %s524
        // Predicated region
        $region37: #{_linear_relu_impl.1} parent=31 // pred_check
          %p526 = pneg %p127
        $region38: #{_linear_relu_impl.1} parent=31 // pred_check_branch
          %528 = sbr.rel (%p526) target = $region40
        $region39: #{_linear_relu_impl.1} parent=31 // pred_region
          %s529 = smul.u32 2, %s22
          %s530 = smul.u32 2, %s21
          %s531 = smul.addr %s529, 4
          %s532 = sadd.s32 %s530, %s531
          %s533 = smul.addr %s532, 8
          %s534 = scalar_lea.vmem %s3, %s533
          // Predicated region
          $region41: #{_linear_relu_impl.1} parent=39 // pred_check
            _
          $region42: #{_linear_relu_impl.1} parent=39 // pred_check_branch
            %536 = sbr.rel (0) target = $region44
          $region43: #{_linear_relu_impl.1} parent=39 // pred_region
            // Predicated region
            $region45: #{_linear_relu_impl.1} parent=43 // pred_check
              _
            $region46: #{_linear_relu_impl.1} parent=43 // pred_check_branch
              %538 = sbr.rel (0) target = $region48
            $region47: #{_linear_relu_impl.1} parent=43 // pred_region
              loop: start=0, step=1, limit=1
              $region49: #{_linear_relu_impl.1} parent=47 // loop_pre_header
                _
              $region50: #{_linear_relu_impl.1} parent=47 // loop_header
                %s540 = sphi 0, %s544
                %p541 = scmp.ge.s32.totalorder %s540, 1
                %s545 = sphi %s525, %s525
                %s546 = sphi %s534, %s534
              $region51: #{_linear_relu_impl.1} parent=47 // loop_header_branch
                %543 = sbr.rel (%p541) target = $region55
              $region52: #{_linear_relu_impl.1} parent=47 // loop_body
                %v547 = vld [vmem:[%s545] sm:$0xff]
                %548 = vst [vmem:[%s546] sm:$0xff] %v547
                %v549 = vld [vmem:[%s545 + $0x8] sm:$0xff]
                %550 = vst [vmem:[%s546 + $0x8] sm:$0xff] %v549
                %v551 = vld [vmem:[%s545 + $0x10] sm:$0xff]
                %552 = vst [vmem:[%s546 + $0x20] sm:$0xff] %v551
                %v553 = vld [vmem:[%s545 + $0x18] sm:$0xff]
                %554 = vst [vmem:[%s546 + $0x28] sm:$0xff] %v553
              $region53: #{_linear_relu_impl.1} parent=47 // loop_footer
                %s544 = sadd.s32 1, %s540
              $region54: #{_linear_relu_impl.1} parent=47 // loop_footer_branch
                %539 = sbr.rel target = $region50
              $region55: #{_linear_relu_impl.1} parent=47 // loop_exit
                _
            $region48: #{_linear_relu_impl.1} parent=43 // pred_fallthru
              _
            // Predicated region
            $region56: #{_linear_relu_impl.1} parent=43 // pred_check
              _
            $region57: #{_linear_relu_impl.1} parent=43 // pred_check_branch
              %556 = sbr.rel target = $region59
            $region58: #{_linear_relu_impl.1} parent=43 // pred_region
              _
            $region59: #{_linear_relu_impl.1} parent=43 // pred_fallthru
              _
          $region44: #{_linear_relu_impl.1} parent=39 // pred_fallthru
            _
          %557 = vnop
        $region40: #{_linear_relu_impl.1} parent=31 // pred_fallthru
          _
      $region32: #{_linear_relu_impl.1} parent=5 // pred_fallthru
        _
      %p558 = scmp.le.s32.totalorder 2, %s12
      // Predicated region
      $region60: #{_linear_relu_impl.1} parent=5 // pred_check
        %p559 = pneg %p558
      $region61: #{_linear_relu_impl.1} parent=5 // pred_check_branch
        %561 = sbr.rel (%p559) target = $region63
      $region62: #{_linear_relu_impl.1} parent=5 // pred_region
        %s562 = ssub.s32 %s12, 2
        // Predicated region
        $region64: #{_linear_relu_impl.1} parent=62 // pred_check
          %p563 = pneg %p133
        $region65: #{_linear_relu_impl.1} parent=62 // pred_check_branch
          %565 = sbr.rel (%p563) target = $region67
        $region66: #{_linear_relu_impl.1} parent=62 // pred_region
          %s566 = sand.u32 %s118, 1
          %s567 = sand.u32 %s118, 1
          %s568 = smul.addr %s567, 32
          %s569 = scalar_lea.vmem [#allocation4], %s568
        $region67: #{_linear_relu_impl.1} parent=62 // pred_fallthru
          _
      $region63: #{_linear_relu_impl.1} parent=5 // pred_fallthru
        _
    $region6: #{_linear_relu_impl.1} parent=1 // loop_footer
      %s16 = sadd.s32 1, %s12
    $region7: #{_linear_relu_impl.1} parent=1 // loop_footer_branch
      %11 = sbr.rel target = $region3
    $region8: #{_linear_relu_impl.1} parent=1 // loop_exit
      _
    %570 = vsyncpa [#allocation3], 1
    %s571 = scalar_lea.sflag [#allocation3], 1
    %572 = vsyncpa %s571, 1

</llo_original>
